<compile_context>
chip_gen: v6e
topology: v6e:2x2x1
jax: 0.10.0
libtpu: 0.0.40
codegen_flags: <defaults>
</compile_context>

<pallas_src>
import jax
import jax.numpy as jnp
from jax.experimental import pallas as pl
from jax.experimental.pallas import tpu as pltpu

IN_FEATURES = 131
HIDDEN = 64
OUT_FEATURES = 41


def fused_linear_kernel(x_ref, w_ref, b_ref, o_ref):
    # One fused dense layer per grid step: (tile, 131) @ (131, 41) + (1, 41).
    acc = jnp.dot(x_ref[...], w_ref[...], preferred_element_type=jnp.float32)
    o_ref[...] = (acc + b_ref[...]).astype(o_ref.dtype)


def fuse_params(w1, b1, w2, b2):
    """Fold the two linear layers (no activation between them) into one.

    Call once and cache the result when the weights are static (inference).
    """
    w = jnp.dot(w1, w2, preferred_element_type=jnp.float32)        # (131, 41)
    b = jnp.dot(b1, w2, preferred_element_type=jnp.float32) + b2   # (1, 41)
    return w, b.reshape(1, OUT_FEATURES)


def _round_up(x, m):
    return (x + m - 1) // m * m


def torch_model_forward_fused(x, w, b, *, tile_b=2048):
    """Forward with pre-fused params. x: (..., 131) -> (B, 41)."""
    x2 = x.reshape(-1, IN_FEATURES)
    B = x2.shape[0]

    # Batch tile: big tiles amortize the ~0.35 us/grid-step pipeline overhead.
    # tile must be a multiple of 8 (sublane constraint) unless it equals the
    # full batch dim (full-extent blocks are always legal).
    if B <= tile_b:
        tile = B
    else:
        tile = _round_up(tile_b, 8)

    grid = (pl.cdiv(B, tile),)  # ragged last block is masked by Pallas

    # Explicit VMEM budget: double-buffered x tile (rows of 131 f32 are stored
    # at 256 lanes) + out tile (41 -> 128 lanes) + resident W/b, + headroom.
    itemsize = jnp.dtype(x2.dtype).itemsize
    sub = _round_up(tile, 8)
    need = 2 * (sub * 256 + sub * 128) * itemsize \
        + 2 * (_round_up(IN_FEATURES, 8) * 128 + 8 * 128) * itemsize
    vmem_limit = int(min(max(need + (4 << 20), 16 << 20), 48 << 20))

    cost = pl.CostEstimate(
        flops=2 * B * IN_FEATURES * OUT_FEATURES,
        transcendentals=0,
        bytes_accessed=(x2.size + w.size + b.size + B * OUT_FEATURES) * itemsize,
    )

    return pl.pallas_call(
        fused_linear_kernel,
        out_shape=jax.ShapeDtypeStruct((B, OUT_FEATURES), x2.dtype),
        grid=grid,
        in_specs=[
            pl.BlockSpec((tile, IN_FEATURES), lambda i: (i, 0)),          # streamed x
            pl.BlockSpec((IN_FEATURES, OUT_FEATURES), lambda i: (0, 0)),  # resident W
            pl.BlockSpec((1, OUT_FEATURES), lambda i: (0, 0)),            # resident b
        ],
        out_specs=pl.BlockSpec((tile, OUT_FEATURES), lambda i: (i, 0)),
        compiler_params=pltpu.CompilerParams(
            dimension_semantics=("parallel",),
            vmem_limit_bytes=vmem_limit,
        ),
        cost_estimate=cost,
    )(x2, w, b)


def torch_model_forward(x, w1, b1, w2, b2, *, tile_b=2048):
    """Convenience wrapper matching the original 4-tensor parameterization."""
    w, b = fuse_params(w1, b1, w2, b2)
    return torch_model_forward_fused(x, w, b, tile_b=tile_b)


def init_params(key):
    """Deterministic init mimicking nn.Linear's uniform(-1/sqrt(fan_in), ...)."""
    k1, k2, k3, k4 = jax.random.split(key, 4)
    bound1 = 1.0 / jnp.sqrt(float(IN_FEATURES))
    bound2 = 1.0 / jnp.sqrt(float(HIDDEN))
    # Stored as (in, out) == transpose of torch's (out, in) weight.
    w1 = jax.random.uniform(k1, (IN_FEATURES, HIDDEN), jnp.float32, -bound1, bound1)
    b1 = jax.random.uniform(k2, (1, HIDDEN), jnp.float32, -bound1, bound1)
    w2 = jax.random.uniform(k3, (HIDDEN, OUT_FEATURES), jnp.float32, -bound2, bound2)
    b2 = jax.random.uniform(k4, (1, OUT_FEATURES), jnp.float32, -bound2, bound2)
    return w1, b1, w2, b2


if __name__ == "__main__":
    key = jax.random.PRNGKey(0)
    kx, kp = jax.random.split(key)
    B = 10
    x = jax.random.normal(kx, (B, IN_FEATURES), jnp.float32)
    w1, b1, w2, b2 = init_params(kp)

    # Reference in plain JAX (same semantics as the torch module, two-step).
    ref = ((x @ w1 + b1) @ w2 + b2).reshape(-1, OUT_FEATURES)

    # Single-block path (tile covers the whole batch).
    out = jax.block_until_ready(torch_model_forward(x, w1, b1, w2, b2))
    assert out.shape == (B, OUT_FEATURES)
    assert jnp.allclose(out, ref, atol=1e-4, rtol=1e-4)

    # Multi-block path with a ragged last block (exercises the cdiv grid /
    # masked writeback that replaced the wrapper-side jnp.pad).
    out2 = jax.block_until_ready(torch_model_forward(x, w1, b1, w2, b2, tile_b=8))
    assert jnp.allclose(out2, ref, atol=1e-4, rtol=1e-4)

    print("KERNEL_OK")
</pallas_src>

<mosaic_0001>
module attributes {stable_mosaic.version = 11 : i64} {
  func.func @fused_linear_kernel(%arg0: i32, %arg1: memref<10x131xf32, #tpu.memory_space<vmem>>, %arg2: memref<131x41xf32, #tpu.memory_space<vmem>>, %arg3: memref<1x41xf32, #tpu.memory_space<vmem>>, %arg4: memref<10x41xf32, #tpu.memory_space<vmem>>) attributes {dimension_semantics = [#tpu.dimension_semantics<parallel>], iteration_bounds = array<i64: 1>, scalar_prefetch = 0 : i64, scratch_operands = 0 : i64, tpu.core_type = #tpu.core_type<tc>, window_params = [{transform_indices = @transform_0, window_bounds = array<i64: 10, 131>}, {pipeline_mode = #tpu.pipeline_mode<synchronous>, transform_indices = @transform_1, window_bounds = array<i64: 131, 41>}, {pipeline_mode = #tpu.pipeline_mode<synchronous>, transform_indices = @transform_2, window_bounds = array<i64: 1, 41>}, {transform_indices = @transform_3, window_bounds = array<i64: 10, 41>}]} {
    %c0 = arith.constant 0 : index
    %c0_0 = arith.constant 0 : index
    %0 = vector.load %arg1[%c0, %c0_0] : memref<10x131xf32, #tpu.memory_space<vmem>>, vector<10x131xf32>
    %c0_1 = arith.constant 0 : index
    %c0_2 = arith.constant 0 : index
    %1 = vector.load %arg2[%c0_1, %c0_2] : memref<131x41xf32, #tpu.memory_space<vmem>>, vector<131x41xf32>
    %cst = arith.constant dense<0.000000e+00> : vector<10x41xf32>
    %2 = tpu.matmul %0, %1, %cst {dimension_numbers = #tpu.dot_dimension_numbers<[1], [0], [0], [1], [0, 0, 1, 1], [], []>} : vector<10x131xf32>, vector<131x41xf32>, vector<10x41xf32> -> vector<10x41xf32>
    %c0_3 = arith.constant 0 : index
    %c0_4 = arith.constant 0 : index
    %3 = vector.load %arg3[%c0_3, %c0_4] : memref<1x41xf32, #tpu.memory_space<vmem>>, vector<1x41xf32>
    %4 = vector.broadcast %3 : vector<1x41xf32> to vector<10x41xf32>
    %5 = arith.addf %2, %4 : vector<10x41xf32>
    %c0_5 = arith.constant 0 : index
    %c0_6 = arith.constant 0 : index
    %6 = vector.load %arg4[%c0_5, %c0_6] : memref<10x41xf32, #tpu.memory_space<vmem>>, vector<10x41xf32>
    tpu.vector_store %arg4[%c0_5, %c0_6], %5 {strides = array<i32>} : memref<10x41xf32, #tpu.memory_space<vmem>>, vector<10x41xf32>,
    return
  }
  func.func @transform_0(%arg0: i32) -> (i32, i32) {
    %c0_i32 = arith.constant 0 : i32
    %c0_i32_0 = arith.constant 0 : i32
    return %arg0, %c0_i32 : i32, i32
  }
  func.func @transform_1(%arg0: i32) -> (i32, i32) {
    %c0_i32 = arith.constant 0 : i32
    %c0_i32_0 = arith.constant 0 : i32
    %c0_i32_1 = arith.constant 0 : i32
    return %c0_i32, %c0_i32_0 : i32, i32
  }
  func.func @transform_2(%arg0: i32) -> (i32, i32) {
    %c0_i32 = arith.constant 0 : i32
    %c0_i32_0 = arith.constant 0 : i32
    %c0_i32_1 = arith.constant 0 : i32
    return %c0_i32, %c0_i32_0 : i32, i32
  }
  func.func @transform_3(%arg0: i32) -> (i32, i32) {
    %c0_i32 = arith.constant 0 : i32
    %c0_i32_0 = arith.constant 0 : i32
    return %arg0, %c0_i32 : i32, i32
  }
}

</mosaic_0001>

<llo_original>
// kernel: tpu_custom_call.1
$region0: #{tpu_custom_call.1}
  #allocation0 [shape = 'u32[]', space=smem, size = 0x4, offset = 0x4, fixed_abs, tag = 'smem constant byte address 0x4 - core index']
  #allocation1 [shape = 'u32[144,128]{1,0:T(1,128)}', space=vmem, size = 0x12000, scoped, tag = 'internal scratch']
  %s0 = inlined_call_operand.vmem [shape: f32[10,131], index: 0, kind: input, shape index: {}]
  %s1 = inlined_call_operand.vmem [shape: f32[131,41], index: 1, kind: input, shape index: {}]
  %s2 = inlined_call_operand.vmem [shape: f32[1,41], index: 2, kind: input, shape index: {}]
  %s3 = inlined_call_operand.hbm [shape: f32[10,41], index: 3, kind: output, shape index: {}]
  %s4 = sld [smem:[#allocation0]]
  $region22: #{tpu_custom_call.1} parent=0
    _
  %s6 = ssub.s32 1, %s4
  %s7 = scalar_select 0, %s6, %s4
  $region1: #{tpu_custom_call.1} parent=0
    #allocation2 [shape = 'u8[8192]{0}', space=vmem, size = 0x2000, scoped, tag = 'output window, operand 0, single buffered']
    #allocation3 [shape = 's32[1]{0}', space=sflag, size = 0x4, scoped, tag = 'scoped memory for tpu_custom_call.1']
    %8 = vsyncpa [#allocation3], 0
    // Predicated region
    $region2: #{tpu_custom_call.1} parent=1 // pred_check
      _
    $region3: #{tpu_custom_call.1} parent=1 // pred_check_branch
      %10 = sbr.rel (0) target = $region5
    $region4: #{tpu_custom_call.1} parent=1 // pred_region
      _
    $region5: #{tpu_custom_call.1} parent=1 // pred_fallthru
      _
    // Predicated region
    $region6: #{tpu_custom_call.1} parent=1 // pred_check
      _
    $region7: #{tpu_custom_call.1} parent=1 // pred_check_branch
      %12 = sbr.rel (0) target = $region9
    $region8: #{tpu_custom_call.1} parent=1 // pred_region
      _
    $region9: #{tpu_custom_call.1} parent=1 // pred_fallthru
      _
    // Predicated region
    $region10: #{tpu_custom_call.1} parent=1 // pred_check
      _
    $region11: #{tpu_custom_call.1} parent=1 // pred_check_branch
      %14 = sbr.rel (0) target = $region13
    $region12: #{tpu_custom_call.1} parent=1 // pred_region
      _
    $region13: #{tpu_custom_call.1} parent=1 // pred_fallthru
      _
    %v15 = vld [vmem:[%s0] sm:$0xff]
    %v16 = vld [vmem:[%s0 + $0x8] sm:$0xff]
    %v17 = vld [vmem:[%s0 + $0x10] sm:$0x3]
    %v18 = vld [vmem:[%s0 + $0x18] sm:$0x3]
    %v19 = vld [vmem:[%s1] sm:$0xff]
    %v20 = vld [vmem:[%s1 + $0x8] sm:$0xff]
    %v21 = vld [vmem:[%s1 + $0x10] sm:$0xff]
    %v22 = vld [vmem:[%s1 + $0x18] sm:$0xff]
    %v23 = vld [vmem:[%s1 + $0x20] sm:$0xff]
    %v24 = vld [vmem:[%s1 + $0x28] sm:$0xff]
    %v25 = vld [vmem:[%s1 + $0x30] sm:$0xff]
    %v26 = vld [vmem:[%s1 + $0x38] sm:$0xff]
    %v27 = vld [vmem:[%s1 + $0x40] sm:$0xff]
    %v28 = vld [vmem:[%s1 + $0x48] sm:$0xff]
    %v29 = vld [vmem:[%s1 + $0x50] sm:$0xff]
    %v30 = vld [vmem:[%s1 + $0x58] sm:$0xff]
    %v31 = vld [vmem:[%s1 + $0x60] sm:$0xff]
    %v32 = vld [vmem:[%s1 + $0x68] sm:$0xff]
    %v33 = vld [vmem:[%s1 + $0x70] sm:$0xff]
    %v34 = vld [vmem:[%s1 + $0x78] sm:$0xff]
    %v35 = vld [vmem:[%s1 + $0x80] sm:$0x7]
    %v36 = vld [vmem:[%s2] sm:$0x1]
    %v38 = vlaneseq
    %v39 = vshrl.u32 %v38, 7
    %v40 = vsub.s32 0, %v39
    %v41 = vrot.slane %v36, %v40
    %vm43 = vcmask 23552
    %v45 = vsel %vm43, %v16, 0
    %v48 = vsel %vm43, %v18, 0
    %vm50 = vcmask 1042432
    %v52 = vsel %vm50, %v35, 0
    %54 = vmatprep.subr.mxu0 0.0
    %55 = vmatpush1.msra.mxu0 %v34
    %56 = vmatprep.subr.mxu0 0.0
    %57 = vmatpush1.msra.mxu0 %v33
    %58 = vmatprep.subr.mxu0 0.0
    %59 = vmatpush1.msra.mxu0 %v32
    %60 = vmatprep.subr.mxu0 0.0
    %61 = vmatpush1.msra.mxu0 %v31
    %62 = vmatprep.subr.mxu0 0.0
    %63 = vmatpush1.msra.mxu0 %v30
    %64 = vmatprep.subr.mxu0 0.0
    %65 = vmatpush1.msra.mxu0 %v29
    %66 = vmatprep.subr.mxu0 0.0
    %67 = vmatpush1.msra.mxu0 %v28
    %68 = vmatprep.subr.mxu0 0.0
    %69 = vmatpush1.msra.mxu0 %v27
    %70 = vmatprep.subr.mxu0 0.0
    %71 = vmatpush1.msra.mxu0 %v26
    %72 = vmatprep.subr.mxu0 0.0
    %73 = vmatpush1.msra.mxu0 %v25
    %74 = vmatprep.subr.mxu0 0.0
    %75 = vmatpush1.msra.mxu0 %v24
    %76 = vmatprep.subr.mxu0 0.0
    %77 = vmatpush1.msra.mxu0 %v23
    %78 = vmatprep.subr.mxu0 0.0
    %79 = vmatpush1.msra.mxu0 %v22
    %80 = vmatprep.subr.mxu0 0.0
    %81 = vmatpush1.msra.mxu0 %v21
    %82 = vmatprep.subr.mxu0 0.0
    %83 = vmatpush1.msra.mxu0 %v20
    %84 = vmatprep.subr.mxu0 0.0
    %85 = vmatpush1.msra.mxu0 %v19
    %86 = vmatprep.subr.mxu0 0.0
    %87 = vmatpush2.msra.mxu0 0.0
    %88 = vmatprep.subr.mxu0 0.0
    %89 = vmatpush2.msra.mxu0 0.0
    %90 = vmatprep.subr.mxu0 0.0
    %91 = vmatpush2.msra.mxu0 0.0
    %92 = vmatprep.subr.mxu0 0.0
    %93 = vmatpush2.msra.mxu0 0.0
    %94 = vmatprep.subr.mxu0 0.0
    %95 = vmatpush2.msra.mxu0 0.0
    %96 = vmatprep.subr.mxu0 0.0
    %97 = vmatpush2.msra.mxu0 0.0
    %98 = vmatprep.subr.mxu0 0.0
    %99 = vmatpush2.msra.mxu0 0.0
    %100 = vmatprep.subr.mxu0 0.0
    %101 = vmatpush2.msra.mxu0 0.0
    %102 = vmatprep.subr.mxu0 0.0
    %103 = vmatpush2.msra.mxu0 0.0
    %104 = vmatprep.subr.mxu0 0.0
    %105 = vmatpush2.msra.mxu0 0.0
    %106 = vmatprep.subr.mxu0 0.0
    %107 = vmatpush2.msra.mxu0 0.0
    %108 = vmatprep.subr.mxu0 0.0
    %109 = vmatpush2.msra.mxu0 0.0
    %110 = vmatprep.subr.mxu0 0.0
    %111 = vmatpush2.msra.mxu0 0.0
    %112 = vmatprep.subr.mxu0 0.0
    %113 = vmatpush2.msra.mxu0 0.0
    %114 = vmatprep.subr.mxu0 0.0
    %115 = vmatpush2.msra.mxu0 0.0
    %116 = vmatprep.subr.mxu0 0.0
    %117 = vmatpush2.msra.mxu0 %v52
    %118 = vmatprep.mubr.f32.mxu0 %v45
    %119 = vmatmul.mubr.f32.gmra.mxu0 %v15
    %v120 = vpop.f32.mrf.mxu0
    %v121 = vadd.f32 %v41, %v120
    %v122 = vpop.f32.mrf.mxu0
    %123 = vmatprep.mubr.f32.mxu0 %v48
    %124 = vmatmul.mubr.f32.gmra.mxu0 %v17
    %v125 = vpop.f32.mrf.mxu0
    %v126 = vadd.f32 %v41, %v125
    %v127 = vpop.f32.mrf.mxu0
    %128 = vdwg.mxu0
    %vm129 = vcmask 334848
    %130 = vst.msk [vmem:[#allocation2] sm:$0xff] %vm129, %v121
    %vm131 = vcmask 328704
    %132 = vst.msk [vmem:[#allocation2 + $0x8] sm:$0x3] %vm131, %v126
    // Predicated region
    $region14: #{tpu_custom_call.1} parent=1 // pred_check
      _
    $region15: #{tpu_custom_call.1} parent=1 // pred_check_branch
      %134 = sbr.rel (0) target = $region17
    $region16: #{tpu_custom_call.1} parent=1 // pred_region
      %s136 = ssub.s32 256, 256
      %137 = vsyncadd [#allocation3], %s136
      %s138 = sshll.u32 [#allocation2], 4
      %s139 = int_to_ptr.vmem [resolvable:$true] %s138
      %144 = dma.vmem_to_hbm [thread:$0]  %s139, 256, %s3, [#allocation3], 128, 128, 8
    $region17: #{tpu_custom_call.1} parent=1 // pred_fallthru
      _
    // Predicated region
    $region18: #{tpu_custom_call.1} parent=1 // pred_check
      _
    $region19: #{tpu_custom_call.1} parent=1 // pred_check_branch
      %146 = sbr.rel (0) target = $region21
    $region20: #{tpu_custom_call.1} parent=1 // pred_region
      %147 = dma.done [#allocation3], 256
    $region21: #{tpu_custom_call.1} parent=1 // pred_fallthru
      _
    %148 = vsyncpa [#allocation3], 1

</llo_original>
